<compile_context>
chip_gen: v5e
topology: v5e:2x2
jax: 0.10.0
libtpu: 0.0.40
codegen_flags: <defaults>
</compile_context>

<pallas_src>
import functools

import jax
import jax.numpy as jnp
from jax import lax
from jax.experimental import pallas as pl
from jax.experimental.pallas import tpu as pltpu


# ---------------------------------------------------------------------------
# VMEM budgeting (per TPU generation)
# ---------------------------------------------------------------------------
def _round_up(x, m):
    return (x + m - 1) // m * m


def _cdiv(a, b):
    return -(-a // b)


def _vmem_budget_and_limit():
    """Derive tile budget from the chip's VMEM (v7x: 64 MiB/TC, v5e/v6e: 128 MiB)."""
    try:
        cap = int(pltpu.get_tpu_info().vmem_capacity_bytes)
    except Exception:  # pragma: no cover - query unavailable
        cap = 64 * 1024 * 1024
    # TODO(synk): confirm get_tpu_info reports per-TensorCore VMEM on v7x (2 TCs
    # per chip, 64 MiB each); halve here if it turns out to be per-chip.
    cap = max(min(cap, 128 * 1024 * 1024), 32 * 1024 * 1024)
    limit = int(cap * 0.75)      # scoped-VMEM limit requested from Mosaic
    budget = int(limit * 0.85)   # what our (estimated) tiles may occupy
    return budget, limit


_VMEM_BUDGET, _VMEM_LIMIT = _vmem_budget_and_limit()


def _sublane_pack(dtype):
    """Sub-32-bit dtypes pack along sublanes: min useful row tile is 8/16/32."""
    return max(8, 32 // jnp.dtype(dtype).itemsize)


def _pick_tm(T, pack, cap):
    """Row tile: <= cap, sublane-pack aligned, splitting T evenly (a batch of
    257 becomes 2 x 136 rows instead of padding up to 512)."""
    cap = max(cap, pack)
    T = max(T, 1)
    if T <= cap:
        return _round_up(T, pack)
    n_tiles = _cdiv(T, cap)
    return _round_up(_cdiv(T, n_tiles), pack)


def _pick_logits_tiles(T, H, V, dtype):
    """Largest (tm, tn) whose pipelined tiles fit the per-chip VMEM budget.

    The streamed operand is charged double-buffered and the resident operand
    single-buffered (its block index is constant along the inner grid axis).
    Prefers a large tm (fewer weight re-streams) over a large tn.
    """
    in_bytes = jnp.dtype(dtype).itemsize
    pack = _sublane_pack(dtype)
    Vp128 = _round_up(V, 128)
    for tm_cap in (512, 256, 128, 64, 32, 16, 8):
        if tm_cap < pack:
            continue
        tm = _pick_tm(T, pack, tm_cap)
        for tn in (2048, 1024, 512, 256, 128):
            if Vp128 % tn != 0:
                continue
            need = ((2 * max(tm, tn) + min(tm, tn)) * H * in_bytes  # operands
                    + 2 * tm * tn * 4                               # f32 logits tile
                    + 4 * tm * 4)                                   # m/l scratch + lse
            if need <= _VMEM_BUDGET:
                return tm, tn
    return _pick_tm(T, pack, pack), 128


# ---------------------------------------------------------------------------
# Kernel bodies
# ---------------------------------------------------------------------------
def _apply_scale_softcap(x, logit_scale, softcap):
    if logit_scale is not None:
        x = x * logit_scale
    if softcap is not None:
        # c * tanh(x / c)  (== fused_softcap's c * (exp(2x/c)-1)/(exp(2x/c)+1))
        x = jnp.tanh(x * (1.0 / softcap)) * softcap
    return x


def _logits_kernel(h_ref, w_ref, o_ref, *, logit_scale, softcap):
    """One (tm, tn) logits tile; no grid-position dependence, so it is used for
    both grid orderings (hidden-resident decode, weight-resident prefill).

    h_ref: (tm, H)   w_ref: (tn, H) contiguous row slab   o_ref: (tm, tn) f32
    """
    # Contract the last dims of both operands (no weight transpose on our side).
    # TODO(synk): check the lowered MLIR for an in-kernel vxpose of the weight
    # tile; if present, pre-transpose the LM head once at load time to (H, V).
    x = lax.dot_general(h_ref[...], w_ref[...],
                        dimension_numbers=(((1,), (1,)), ((), ())),
                        preferred_element_type=jnp.float32)
    o_ref[...] = _apply_scale_softcap(x, logit_scale, softcap).astype(o_ref.dtype)


def _logits_lse_kernel(h_ref, w_ref, o_ref, lse_ref, m_sc, l_sc, *,
                       logit_scale, softcap, vocab_size, tn, mask_cols):
    """Fused logits + online row log-sum-exp.  grid = (rows, vocab), vocab inner.

    The running (m, l) softmax state lives in (tm, 1) f32 VMEM scratch that is
    resident across the vocab sweep; LSE is emitted on the last vocab tile so
    log_softmax downstream collapses to `logits - lse`.
    """
    j = pl.program_id(1)

    @pl.when(j == 0)
    def _():
        m_sc[...] = jnp.full(m_sc.shape, -jnp.inf, m_sc.dtype)
        l_sc[...] = jnp.zeros(l_sc.shape, l_sc.dtype)

    x = lax.dot_general(h_ref[...], w_ref[...],
                        dimension_numbers=(((1,), (1,)), ((), ())),
                        preferred_element_type=jnp.float32)
    x = _apply_scale_softcap(x, logit_scale, softcap)
    o_ref[...] = x.astype(o_ref.dtype)

    if mask_cols:
        # Exclude padded vocab columns (>= vocab_size) from the LSE.
        col = j * tn + lax.broadcasted_iota(jnp.int32, x.shape, 1)
        x = jnp.where(col < vocab_size, x, -jnp.inf)

    m_prev = m_sc[...]
    m_new = jnp.maximum(m_prev, jnp.max(x, axis=-1, keepdims=True))
    alpha = jnp.exp(m_prev - m_new)
    l_sc[...] = alpha * l_sc[...] + jnp.sum(jnp.exp(x - m_new), axis=-1, keepdims=True)
    m_sc[...] = m_new

    @pl.when(j == pl.num_programs(1) - 1)
    def _():
        lse_ref[...] = m_sc[...] + jnp.log(l_sc[...])


# ---------------------------------------------------------------------------
# pallas_call wrappers
# ---------------------------------------------------------------------------
def _pad_operands(hidden, weight, tm, tn):
    T, _ = hidden.shape
    V, _ = weight.shape
    Tp, Vp = _round_up(T, tm), _round_up(V, tn)
    if Tp != T:
        hidden = jnp.pad(hidden, ((0, Tp - T), (0, 0)))
    if Vp != V:
        # TODO(synk): pad the LM head once at weight-load time; per-call padding
        # re-materializes the (V, H) weight for non-128-multiple vocab sizes.
        weight = jnp.pad(weight, ((0, Vp - V), (0, 0)))
    return hidden, weight, Tp, Vp


def pallas_get_logits(hidden, weight, *, logit_scale=None, softcap=None, _tiles=None):
    """hidden (T, H), weight (V, H) -> float32 logits (T, V), scaled + softcapped."""
    T, H = hidden.shape
    V, H2 = weight.shape
    assert H == H2
    tm, tn = _tiles if _tiles is not None else _pick_logits_tiles(T, H, V, hidden.dtype)
    hidden, weight, Tp, Vp = _pad_operands(hidden, weight, tm, tn)
    n_row, n_vocab = Tp // tm, Vp // tn

    kernel = functools.partial(_logits_kernel, logit_scale=logit_scale, softcap=softcap)

    if n_row == 1:
        # Decode-style: the single hidden block stays resident across the vocab
        # sweep; each weight row-slab is streamed from HBM exactly once.
        # TODO(synk): pipeline_mode=pl.Buffered(1) on the resident spec would
        # reclaim its second buffer once uniformly supported.
        grid = (n_row, n_vocab)
        h_spec = pl.BlockSpec((tm, H), lambda i, j: (i, 0))
        w_spec = pl.BlockSpec((tn, H), lambda i, j: (j, 0))
        o_spec = pl.BlockSpec((tm, tn), lambda i, j: (i, j))
    else:
        # Prefill-style (many row tiles): swap residency -- vocab outer, rows
        # inner, weight slab resident across the inner sweep -> the (V, H)
        # weight is streamed once, only the much smaller hidden is re-streamed.
        grid = (n_vocab, n_row)
        h_spec = pl.BlockSpec((tm, H), lambda j, i: (i, 0))
        w_spec = pl.BlockSpec((tn, H), lambda j, i: (j, 0))
        o_spec = pl.BlockSpec((tm, tn), lambda j, i: (i, j))

    out = pl.pallas_call(
        kernel,
        out_shape=jax.ShapeDtypeStruct((Tp, Vp), jnp.float32),
        grid_spec=pltpu.PrefetchScalarGridSpec(
            num_scalar_prefetch=0,
            grid=grid,
            in_specs=[h_spec, w_spec],
            out_specs=o_spec,
        ),
        compiler_params=pltpu.CompilerParams(
            dimension_semantics=("parallel", "parallel"),
            vmem_limit_bytes=_VMEM_LIMIT,
        ),
    )(hidden, weight)
    if Tp != T or Vp != V:
        out = out[:T, :V]
    return out


def pallas_get_logits_lse(hidden, weight, vocab_size, *, logit_scale=None,
                          softcap=None, _tiles=None):
    """Fused lm_head matmul + scale + softcap + online row-logsumexp.

    Returns (logits[T, vocab_size] f32, lse[T] f32); log-probs are simply
    `logits - lse[:, None]`, so no separate (T, V) log_softmax pass is needed.
    """
    T, H = hidden.shape
    V, H2 = weight.shape
    assert H == H2 and vocab_size <= V
    tm, tn = _tiles if _tiles is not None else _pick_logits_tiles(T, H, V, hidden.dtype)
    hidden, weight, Tp, Vp = _pad_operands(hidden, weight, tm, tn)
    mask_cols = (Vp != vocab_size)

    kernel = functools.partial(
        _logits_lse_kernel, logit_scale=logit_scale, softcap=softcap,
        vocab_size=vocab_size, tn=tn, mask_cols=mask_cols)

    # Rows outer ("parallel": on v7x each TC owns whole rows -> no LSE combine),
    # vocab inner ("arbitrary": online-LSE reduction with resident scratch).
    # TODO(synk): a weight-resident variant (vocab outer, (Tp,1) scratch) would
    # additionally stream the weight exactly once on this path.
    logits, lse = pl.pallas_call(
        kernel,
        out_shape=(jax.ShapeDtypeStruct((Tp, Vp), jnp.float32),
                   jax.ShapeDtypeStruct((Tp, 1), jnp.float32)),
        grid_spec=pltpu.PrefetchScalarGridSpec(
            num_scalar_prefetch=0,
            grid=(Tp // tm, Vp // tn),
            in_specs=[pl.BlockSpec((tm, H), lambda i, j: (i, 0)),
                      pl.BlockSpec((tn, H), lambda i, j: (j, 0))],
            out_specs=[pl.BlockSpec((tm, tn), lambda i, j: (i, j)),
                       pl.BlockSpec((tm, 1), lambda i, j: (i, 0))],
            scratch_shapes=[pltpu.VMEM((tm, 1), jnp.float32),
                            pltpu.VMEM((tm, 1), jnp.float32)],
        ),
        compiler_params=pltpu.CompilerParams(
            dimension_semantics=("parallel", "arbitrary"),
            vmem_limit_bytes=_VMEM_LIMIT,
        ),
    )(hidden, weight)
    return logits[:T, :vocab_size], lse[:T, 0]


# ---------------------------------------------------------------------------
# LogitsProcessor (JAX/Pallas port) -- single-device (no TP all-gather)
# ---------------------------------------------------------------------------
class LogitsProcessorPallas:
    def __init__(self, vocab_size, logit_scale=None, final_logit_softcapping=None):
        self.vocab_size = vocab_size
        self.logit_scale = logit_scale
        self.final_logit_softcapping = final_logit_softcapping
        if self.final_logit_softcapping is not None and self.final_logit_softcapping < 0:
            self.final_logit_softcapping = None
        # TODO(synk): tensor_model_parallel_all_gather not applicable single-device.
        # TODO(synk): on v5e/v6e stream an int8-quantized LM head for decode
        # (halves weight HBM traffic); not portable to v7x (fp8-only MXU).

    def _get_logits(self, hidden_states, lm_head_weight):
        logits = pallas_get_logits(
            hidden_states, lm_head_weight,
            logit_scale=self.logit_scale, softcap=self.final_logit_softcapping)
        return logits[:, : self.vocab_size]

    def forward(self, input_ids, hidden_states, lm_head_weight, *,
                is_decode=False, return_logprob=False,
                extend_seq_lens=None,            # list[int]
                extend_logprob_start_lens=None,  # list[int]
                top_logprobs_nums=None):         # list[int] or None
        if not return_logprob or is_decode:
            if is_decode:
                last_hidden = hidden_states
            else:
                last_index = jnp.cumsum(jnp.array(extend_seq_lens, jnp.int32)) - 1
                last_hidden = hidden_states[last_index]
            return {"next_token_logits": self._get_logits(last_hidden, lm_head_weight)}

        # --- extend / return-logprob path -----------------------------------
        pt, pruned_states, pruned_input_ids, pruned_lens = 0, [], [], []
        for start_len, extend_len in zip(extend_logprob_start_lens, extend_seq_lens):
            pruned_states.append(hidden_states[pt + start_len: pt + extend_len])
            pruned_input_ids.append(input_ids[pt + start_len: pt + extend_len])
            pruned_lens.append(extend_len - start_len)
            pt += extend_len
        pruned_states = jnp.concatenate(pruned_states, axis=0)

        # Single fused weight sweep: logits + per-row logsumexp.
        input_token_logits, lse = pallas_get_logits_lse(
            pruned_states, lm_head_weight, self.vocab_size,
            logit_scale=self.logit_scale, softcap=self.final_logit_softcapping)

        # The last token of each extend segment is the final row of its pruned
        # slice, so slice next-token logits out of input_token_logits instead
        # of running a second full lm_head sweep.
        if all(l > 0 for l in pruned_lens):
            seg_last = jnp.cumsum(jnp.array(pruned_lens, jnp.int32)) - 1
            last_logits = input_token_logits[seg_last]
        else:
            last_index = jnp.cumsum(jnp.array(extend_seq_lens, jnp.int32)) - 1
            last_logits = self._get_logits(hidden_states[last_index], lm_head_weight)

        # Top-k log-probs: top_k over raw logits, then subtract the row LSE
        # (log_softmax is a per-row shift -> identical indices, shifted values).
        if top_logprobs_nums is not None and any(k > 0 for k in top_logprobs_nums):
            max_k = max(top_logprobs_nums)
            vals, idxs = lax.top_k(input_token_logits, max_k)
            vals = vals - lse[:, None]
            top_val, top_idx, p = [], [], 0
            for k, plen in zip(top_logprobs_nums, pruned_lens):
                if plen <= 0:
                    top_val.append([])
                    top_idx.append([])
                    continue
                top_val.append(vals[p: p + plen - 1, :k])
                top_idx.append(idxs[p: p + plen - 1, :k])
                p += plen
        else:
            top_val = top_idx = None

        cat_ids = jnp.concatenate(pruned_input_ids)
        gather_ids = jnp.concatenate([cat_ids[1:], jnp.zeros((1,), cat_ids.dtype)])
        n_rows = input_token_logits.shape[0]
        input_token_logprobs = input_token_logits[jnp.arange(n_rows), gather_ids] - lse

        # normalized prompt logprobs (same formula as the torch module)
        logprobs_cumsum = jnp.cumsum(input_token_logprobs, dtype=jnp.float32)
        pruned_lens_a = jnp.array(pruned_lens, jnp.int32)
        start = jnp.zeros_like(pruned_lens_a)
        start = start.at[1:].set(jnp.cumsum(pruned_lens_a[:-1]))
        end = jnp.clip(start + pruned_lens_a - 2, 0, n_rows - 1)
        sum_logp = (logprobs_cumsum[end] - logprobs_cumsum[start]
                    + input_token_logprobs[start])
        normalized_prompt_logprobs = sum_logp / jnp.clip(pruned_lens_a - 1, 1, None)

        return {
            "next_token_logits": last_logits,
            "normalized_prompt_logprobs": normalized_prompt_logprobs,
            "input_token_logprobs": input_token_logprobs,
            "input_top_logprobs_val": top_val,
            "input_top_logprobs_idx": top_idx,
        }


# ---------------------------------------------------------------------------
# Pure-JAX reference for correctness checks
# ---------------------------------------------------------------------------
def _ref_logits(h, w, logit_scale, softcap, vocab_size):
    x = (h @ w.T).astype(jnp.float32)
    if logit_scale is not None:
        x = x * logit_scale
    x = x[:, :vocab_size]
    if softcap is not None:
        x = jnp.tanh(x / softcap) * softcap
    return x


def _ref_log_softmax(x):
    m = jnp.max(x, axis=-1, keepdims=True)
    return x - (jnp.log(jnp.sum(jnp.exp(x - m), axis=-1, keepdims=True)) + m)


if __name__ == "__main__":
    key = jax.random.PRNGKey(0)
    H, V = 128, 256
    extend_seq_lens = [5, 7]
    extend_logprob_start_lens = [2, 3]
    T = sum(extend_seq_lens)

    k1, k2, k3 = jax.random.split(key, 3)
    hidden_states = jax.random.normal(k1, (T, H), jnp.float32)
    lm_head_weight = jax.random.normal(k2, (V, H), jnp.float32) * 0.05
    input_ids = jax.random.randint(k3, (T,), 0, V, jnp.int32)

    proc = LogitsProcessorPallas(vocab_size=V, logit_scale=0.5,
                                 final_logit_softcapping=30.0)

    out = proc.forward(
        input_ids, hidden_states, lm_head_weight,
        is_decode=False, return_logprob=True,
        extend_seq_lens=extend_seq_lens,
        extend_logprob_start_lens=extend_logprob_start_lens,
        top_logprobs_nums=[2, 3])
    jax.block_until_ready(out["next_token_logits"])
    jax.block_until_ready(out["input_token_logprobs"])
    jax.block_until_ready(out["input_top_logprobs_val"][1])

    tol = dict(atol=2e-4, rtol=2e-4)

    # next-token logits (deduplicated path)
    last_index = jnp.cumsum(jnp.array(extend_seq_lens, jnp.int32)) - 1
    ref_last = _ref_logits(hidden_states[last_index], lm_head_weight, 0.5, 30.0, V)
    assert jnp.allclose(out["next_token_logits"], ref_last, **tol)

    # per-token logprobs via the fused LSE
    pts = [0, extend_seq_lens[0]]
    pruned = jnp.concatenate([
        hidden_states[pt + s: pt + e]
        for (s, e, pt) in zip(extend_logprob_start_lens, extend_seq_lens, pts)])
    ref_logits = _ref_logits(pruned, lm_head_weight, 0.5, 30.0, V)
    ref_lp = _ref_log_softmax(ref_logits)
    cat_ids = jnp.concatenate([
        input_ids[pt + s: pt + e]
        for (s, e, pt) in zip(extend_logprob_start_lens, extend_seq_lens, pts)])
    gather_ids = jnp.concatenate([cat_ids[1:], jnp.zeros((1,), cat_ids.dtype)])
    ref_tok_lp = ref_lp[jnp.arange(ref_lp.shape[0]), gather_ids]
    assert jnp.allclose(out["input_token_logprobs"], ref_tok_lp, **tol)

    # top-logprobs (segment 0: k=2 over 2 rows; segment 1: k=3 over 3 rows)
    ref_vals, _ = lax.top_k(ref_lp, 3)
    assert jnp.allclose(out["input_top_logprobs_val"][0], ref_vals[0:2, :2], **tol)
    assert jnp.allclose(out["input_top_logprobs_val"][1], ref_vals[3:6, :3], **tol)

    # normalized prompt logprobs
    plens = [e - s for s, e in zip(extend_logprob_start_lens, extend_seq_lens)]
    starts = [0, plens[0]]
    ref_norm = jnp.stack([
        jnp.sum(ref_tok_lp[st: st + pl_ - 1]) / max(pl_ - 1, 1)
        for st, pl_ in zip(starts, plens)])
    assert jnp.allclose(out["normalized_prompt_logprobs"], ref_norm, **tol)

    # decode mode (plain kernel, hidden-resident ordering)
    dec = proc.forward(input_ids[:2], hidden_states[:2], lm_head_weight, is_decode=True)
    jax.block_until_ready(dec["next_token_logits"])
    ref_dec = _ref_logits(hidden_states[:2], lm_head_weight, 0.5, 30.0, V)
    assert jnp.allclose(dec["next_token_logits"], ref_dec, **tol)

    # multi-row-tile prefill (plain kernel, weight-resident / swapped ordering)
    big_hidden = jax.random.normal(jax.random.PRNGKey(1), (520, H), jnp.float32)
    big = pallas_get_logits(big_hidden, lm_head_weight,
                            logit_scale=0.5, softcap=30.0, _tiles=(264, 128))
    ref_big = _ref_logits(big_hidden, lm_head_weight, 0.5, 30.0, V)
    assert jnp.allclose(big, ref_big, **tol)

    # fused kernel with multiple vocab tiles + masked (ragged) vocab_size
    lg_m, lse_m = pallas_get_logits_lse(pruned, lm_head_weight, 250,
                                        logit_scale=0.5, softcap=30.0,
                                        _tiles=(8, 128))
    ref250 = _ref_logits(pruned, lm_head_weight, 0.5, 30.0, V)[:, :250]
    m = jnp.max(ref250, axis=-1)
    ref_lse = m + jnp.log(jnp.sum(jnp.exp(ref250 - m[:, None]), axis=-1))
    assert jnp.allclose(lg_m, ref250, **tol)
    assert jnp.allclose(lse_m, ref_lse, **tol)

    print("KERNEL_OK")
</pallas_src>

<mosaic_0001>
module attributes {stable_mosaic.version = 11 : i64} {
  func.func @_logits_lse_kernel(%arg0: i32, %arg1: i32, %arg2: memref<8x128xf32, #tpu.memory_space<vmem>>, %arg3: memref<256x128xf32, #tpu.memory_space<vmem>>, %arg4: memref<8x256xf32, #tpu.memory_space<vmem>>, %arg5: memref<8x1xf32, #tpu.memory_space<vmem>>, %arg6: memref<8x1xf32, #tpu.memory_space<vmem>>, %arg7: memref<8x1xf32, #tpu.memory_space<vmem>>) attributes {dimension_semantics = [#tpu.dimension_semantics<parallel>, #tpu.dimension_semantics<arbitrary>], iteration_bounds = array<i64: 1, 1>, scalar_prefetch = 0 : i64, scratch_operands = 2 : i64, tpu.core_type = #tpu.core_type<tc>, window_params = [{transform_indices = @transform_0, window_bounds = array<i64: 8, 128>}, {transform_indices = @transform_1, window_bounds = array<i64: 256, 128>}, {transform_indices = @transform_2, window_bounds = array<i64: 8, 256>}, {transform_indices = @transform_3, window_bounds = array<i64: 8, 1>}]} {
    %c0_i32 = arith.constant 0 : i32
    %0 = arith.cmpi eq, %arg1, %c0_i32 : i32
    %1 = arith.extui %0 : i1 to i32
    %c0_i32_0 = arith.constant 0 : i32
    %2 = arith.cmpi ne, %1, %c0_i32_0 : i32
    scf.if %2 {
      %cst_21 = arith.constant 0xFF800000 : f32
      %33 = vector.broadcast %cst_21 : f32 to vector<8x1xf32>
      %c0_22 = arith.constant 0 : index
      %c0_23 = arith.constant 0 : index
      %34 = vector.load %arg6[%c0_22, %c0_23] : memref<8x1xf32, #tpu.memory_space<vmem>>, vector<8x1xf32>
      tpu.vector_store %arg6[%c0_22, %c0_23], %33 {strides = array<i32>} : memref<8x1xf32, #tpu.memory_space<vmem>>, vector<8x1xf32>,
      %cst_24 = arith.constant 0.000000e+00 : f32
      %35 = vector.broadcast %cst_24 : f32 to vector<8x1xf32>
      %c0_25 = arith.constant 0 : index
      %c0_26 = arith.constant 0 : index
      %36 = vector.load %arg7[%c0_25, %c0_26] : memref<8x1xf32, #tpu.memory_space<vmem>>, vector<8x1xf32>
      tpu.vector_store %arg7[%c0_25, %c0_26], %35 {strides = array<i32>} : memref<8x1xf32, #tpu.memory_space<vmem>>, vector<8x1xf32>,
    } else {
    }
    %c0 = arith.constant 0 : index
    %c0_1 = arith.constant 0 : index
    %3 = vector.load %arg2[%c0, %c0_1] : memref<8x128xf32, #tpu.memory_space<vmem>>, vector<8x128xf32>
    %c0_2 = arith.constant 0 : index
    %c0_3 = arith.constant 0 : index
    %4 = vector.load %arg3[%c0_2, %c0_3] : memref<256x128xf32, #tpu.memory_space<vmem>>, vector<256x128xf32>
    %cst = arith.constant dense<0.000000e+00> : vector<8x256xf32>
    %5 = tpu.matmul %3, %4, %cst {dimension_numbers = #tpu.dot_dimension_numbers<[1], [1], [0], [0], [0, 0, 1, 0], [], []>} : vector<8x128xf32>, vector<256x128xf32>, vector<8x256xf32> -> vector<8x256xf32>
    %cst_4 = arith.constant 5.000000e-01 : f32
    %6 = vector.broadcast %cst_4 : f32 to vector<8x256xf32>
    %7 = arith.mulf %5, %6 : vector<8x256xf32>
    %cst_5 = arith.constant 0.0333333351 : f32
    %8 = vector.broadcast %cst_5 : f32 to vector<8x256xf32>
    %9 = arith.mulf %7, %8 : vector<8x256xf32>
    %10 = math.tanh %9 : vector<8x256xf32>
    %cst_6 = arith.constant 3.000000e+01 : f32
    %11 = vector.broadcast %cst_6 : f32 to vector<8x256xf32>
    %12 = arith.mulf %10, %11 : vector<8x256xf32>
    %c0_7 = arith.constant 0 : index
    %c0_8 = arith.constant 0 : index
    %13 = vector.load %arg4[%c0_7, %c0_8] : memref<8x256xf32, #tpu.memory_space<vmem>>, vector<8x256xf32>
    tpu.vector_store %arg4[%c0_7, %c0_8], %12 {strides = array<i32>} : memref<8x256xf32, #tpu.memory_space<vmem>>, vector<8x256xf32>,
    %c0_9 = arith.constant 0 : index
    %c0_10 = arith.constant 0 : index
    %14 = vector.load %arg6[%c0_9, %c0_10] : memref<8x1xf32, #tpu.memory_space<vmem>>, vector<8x1xf32>
    %cst_11 = arith.constant dense<0xFF800000> : vector<8xf32>
    %15 = vector.multi_reduction <maximumf>, %12, %cst_11 [1] : vector<8x256xf32> to vector<8xf32>
    %16 = vector.shape_cast %15 : vector<8xf32> to vector<8x1xf32>
    %17 = arith.maximumf %14, %16 : vector<8x1xf32>
    %18 = arith.subf %14, %17 : vector<8x1xf32>
    %19 = math.exp %18 : vector<8x1xf32>
    %c0_12 = arith.constant 0 : index
    %c0_13 = arith.constant 0 : index
    %20 = vector.load %arg7[%c0_12, %c0_13] : memref<8x1xf32, #tpu.memory_space<vmem>>, vector<8x1xf32>
    %21 = arith.mulf %19, %20 : vector<8x1xf32>
    %22 = vector.broadcast %17 : vector<8x1xf32> to vector<8x256xf32>
    %23 = arith.subf %12, %22 : vector<8x256xf32>
    %24 = math.exp %23 : vector<8x256xf32>
    %cst_14 = arith.constant dense<0.000000e+00> : vector<8xf32>
    %25 = vector.multi_reduction <add>, %24, %cst_14 [1] : vector<8x256xf32> to vector<8xf32>
    %26 = vector.shape_cast %25 : vector<8xf32> to vector<8x1xf32>
    %27 = arith.addf %21, %26 : vector<8x1xf32>
    %c0_15 = arith.constant 0 : index
    %c0_16 = arith.constant 0 : index
    %28 = vector.load %arg7[%c0_15, %c0_16] : memref<8x1xf32, #tpu.memory_space<vmem>>, vector<8x1xf32>
    tpu.vector_store %arg7[%c0_15, %c0_16], %27 {strides = array<i32>} : memref<8x1xf32, #tpu.memory_space<vmem>>, vector<8x1xf32>,
    %c0_17 = arith.constant 0 : index
    %c0_18 = arith.constant 0 : index
    %29 = vector.load %arg6[%c0_17, %c0_18] : memref<8x1xf32, #tpu.memory_space<vmem>>, vector<8x1xf32>
    tpu.vector_store %arg6[%c0_17, %c0_18], %17 {strides = array<i32>} : memref<8x1xf32, #tpu.memory_space<vmem>>, vector<8x1xf32>,
    %c0_i32_19 = arith.constant 0 : i32
    %30 = arith.cmpi eq, %arg1, %c0_i32_19 : i32
    %31 = arith.extui %30 : i1 to i32
    %c0_i32_20 = arith.constant 0 : i32
    %32 = arith.cmpi ne, %31, %c0_i32_20 : i32
    scf.if %32 {
      %c0_21 = arith.constant 0 : index
      %c0_22 = arith.constant 0 : index
      %33 = vector.load %arg6[%c0_21, %c0_22] : memref<8x1xf32, #tpu.memory_space<vmem>>, vector<8x1xf32>
      %c0_23 = arith.constant 0 : index
      %c0_24 = arith.constant 0 : index
      %34 = vector.load %arg7[%c0_23, %c0_24] : memref<8x1xf32, #tpu.memory_space<vmem>>, vector<8x1xf32>
      %35 = math.log %34 : vector<8x1xf32>
      %36 = arith.addf %33, %35 : vector<8x1xf32>
      %c0_25 = arith.constant 0 : index
      %c0_26 = arith.constant 0 : index
      %37 = vector.load %arg5[%c0_25, %c0_26] : memref<8x1xf32, #tpu.memory_space<vmem>>, vector<8x1xf32>
      tpu.vector_store %arg5[%c0_25, %c0_26], %36 {strides = array<i32>} : memref<8x1xf32, #tpu.memory_space<vmem>>, vector<8x1xf32>,
    } else {
    }
    return
  }
  func.func @transform_0(%arg0: i32, %arg1: i32) -> (i32, i32) {
    %c0_i32 = arith.constant 0 : i32
    %c0_i32_0 = arith.constant 0 : i32
    return %arg0, %c0_i32 : i32, i32
  }
  func.func @transform_1(%arg0: i32, %arg1: i32) -> (i32, i32) {
    %c0_i32 = arith.constant 0 : i32
    %c0_i32_0 = arith.constant 0 : i32
    return %arg1, %c0_i32 : i32, i32
  }
  func.func @transform_2(%arg0: i32, %arg1: i32) -> (i32, i32) {
    %c0_i32 = arith.constant 0 : i32
    return %arg0, %arg1 : i32, i32
  }
  func.func @transform_3(%arg0: i32, %arg1: i32) -> (i32, i32) {
    %c0_i32 = arith.constant 0 : i32
    %c0_i32_0 = arith.constant 0 : i32
    return %arg0, %c0_i32 : i32, i32
  }
}

</mosaic_0001>

<llo_original>
// kernel: tpu_custom_call.1
$region0: #{tpu_custom_call.1}
  #allocation0 [shape = 'u32[]', space=smem, size = 0x4, offset = 0x4, fixed_abs, tag = 'smem constant byte address 0x4 - core index']
  #allocation1 [shape = 'u32[72,128]{1,0:T(1,128)}', space=vmem, size = 0x9000, scoped, tag = 'internal scratch']
  #allocation2 [shape = 'f32[8,1]{1,0:T(8,128)}', space=vmem, size = 0x1000, scoped, tag = 'scratch operand']
  #allocation3 [shape = 'f32[8,1]{1,0:T(8,128)}', space=vmem, size = 0x1000, scoped, tag = 'scratch operand']
  %s0 = inlined_call_operand.hbm [shape: f32[8,128], index: 0, kind: input, shape index: {}]
  %s1 = inlined_call_operand.hbm [shape: f32[256,128], index: 1, kind: input, shape index: {}]
  %s2 = inlined_call_operand.hbm [shape: f32[8,256], index: 2, kind: output, shape index: {0}]
  %s3 = inlined_call_operand.vmem [shape: f32[8,1], index: 3, kind: output, shape index: {1}]
  %4 = xla_tuple %s2, %s3
  %s5 = sld [smem:[#allocation0]]
  $region42: #{tpu_custom_call.1} parent=0
    _
  %s7 = ssub.s32 1, %s5
  %s8 = scalar_select 0, %s7, %s5
  $region1: #{tpu_custom_call.1} parent=0
    #allocation4 [shape = 'u8[4096]{0}', space=vmem, size = 0x1000, scoped, tag = 'input window, operand 0, single buffered']
    #allocation5 [shape = 's32[1]{0}', space=sflag, size = 0x4, scoped, tag = 'scoped memory for tpu_custom_call.1']
    #allocation6 [shape = 's32[1]{0}', space=sflag, size = 0x4, scoped, tag = 'scoped memory for tpu_custom_call.1']
    #allocation7 [shape = 'u8[131072]{0}', space=vmem, size = 0x20000, scoped, tag = 'input window, operand 1, single buffered']
    #allocation8 [shape = 's32[1]{0}', space=sflag, size = 0x4, scoped, tag = 'scoped memory for tpu_custom_call.1']
    #allocation9 [shape = 'u8[8192]{0}', space=vmem, size = 0x2000, scoped, tag = 'output window, operand 0, single buffered']
    %9 = vsyncpa [#allocation5], 0
    %10 = vsyncpa [#allocation8], 0
    %11 = vsyncpa [#allocation6], 0
    // Predicated region
    $region2: #{tpu_custom_call.1} parent=1 // pred_check
      _
    $region3: #{tpu_custom_call.1} parent=1 // pred_check_branch
      %13 = sbr.rel (0) target = $region5
    $region4: #{tpu_custom_call.1} parent=1 // pred_region
      %15 = vsyncadd [#allocation5], 0
      %s17 = sshll.u32 %s0, 4
      %s18 = int_to_ptr.hbm [resolvable:$true] %s17
      %s19 = sshll.u32 [#allocation4], 4
      %s20 = int_to_ptr.vmem [resolvable:$true] %s19
      %22 = dma.hbm_to_vmem [thread:$0]  %s18, 128, %s20, [#allocation5]
    $region5: #{tpu_custom_call.1} parent=1 // pred_fallthru
      _
    // Predicated region
    $region6: #{tpu_custom_call.1} parent=1 // pred_check
      _
    $region7: #{tpu_custom_call.1} parent=1 // pred_check_branch
      %24 = sbr.rel (0) target = $region9
    $region8: #{tpu_custom_call.1} parent=1 // pred_region
      %26 = vsyncadd [#allocation8], 0
      %s27 = sshll.u32 %s1, 4
      %s28 = int_to_ptr.hbm [resolvable:$true] %s27
      %s29 = sshll.u32 [#allocation7], 4
      %s30 = int_to_ptr.vmem [resolvable:$true] %s29
      %35 = dma.hbm_to_vmem [thread:$0]  %s28, 4096, %s30, [#allocation8], 128, 128, 8
    $region9: #{tpu_custom_call.1} parent=1 // pred_fallthru
      _
    // Predicated region
    $region10: #{tpu_custom_call.1} parent=1 // pred_check
      _
    $region11: #{tpu_custom_call.1} parent=1 // pred_check_branch
      %37 = sbr.rel (0) target = $region13
    $region12: #{tpu_custom_call.1} parent=1 // pred_region
      %39 = dma.done [#allocation5], 128
    $region13: #{tpu_custom_call.1} parent=1 // pred_fallthru
      _
    // Predicated region
    $region14: #{tpu_custom_call.1} parent=1 // pred_check
      _
    $region15: #{tpu_custom_call.1} parent=1 // pred_check_branch
      %41 = sbr.rel (0) target = $region17
    $region16: #{tpu_custom_call.1} parent=1 // pred_region
      %43 = dma.done [#allocation8], 4096
    $region17: #{tpu_custom_call.1} parent=1 // pred_fallthru
      _
    %p44 = scmp.eq.s32.totalorder 0, 0
    // Predicated region
    $region18: #{tpu_custom_call.1} parent=1 // pred_check
      %p45 = pneg %p44
    $region19: #{tpu_custom_call.1} parent=1 // pred_check_branch
      %47 = sbr.rel (%p45) target = $region21
    $region20: #{tpu_custom_call.1} parent=1 // pred_region
      %vm48 = vcmask 7168
      %49 = vst.msk [vmem:[#allocation2] sm:$0xff] %vm48, -inf
      %50 = vst.msk [vmem:[#allocation3] sm:$0xff] %vm48, 0.0
    $region21: #{tpu_custom_call.1} parent=1 // pred_fallthru
      _
    %v51 = vld [vmem:[#allocation4] sm:$0xff]
    %v52 = vld [vmem:[#allocation7] sm:$0xff]
    %v53 = vld [vmem:[#allocation7 + $0x8] sm:$0xff]
    %v54 = vld [vmem:[#allocation7 + $0x10] sm:$0xff]
    %v55 = vld [vmem:[#allocation7 + $0x18] sm:$0xff]
    %v56 = vld [vmem:[#allocation7 + $0x20] sm:$0xff]
    %v57 = vld [vmem:[#allocation7 + $0x28] sm:$0xff]
    %v58 = vld [vmem:[#allocation7 + $0x30] sm:$0xff]
    %v59 = vld [vmem:[#allocation7 + $0x38] sm:$0xff]
    %v60 = vld [vmem:[#allocation7 + $0x40] sm:$0xff]
    %v61 = vld [vmem:[#allocation7 + $0x48] sm:$0xff]
    %v62 = vld [vmem:[#allocation7 + $0x50] sm:$0xff]
    %v63 = vld [vmem:[#allocation7 + $0x58] sm:$0xff]
    %v64 = vld [vmem:[#allocation7 + $0x60] sm:$0xff]
    %v65 = vld [vmem:[#allocation7 + $0x68] sm:$0xff]
    %v66 = vld [vmem:[#allocation7 + $0x70] sm:$0xff]
    %v67 = vld [vmem:[#allocation7 + $0x78] sm:$0xff]
    %v68 = vld [vmem:[#allocation7 + $0x80] sm:$0xff]
    %v69 = vld [vmem:[#allocation7 + $0x88] sm:$0xff]
    %v70 = vld [vmem:[#allocation7 + $0x90] sm:$0xff]
    %v71 = vld [vmem:[#allocation7 + $0x98] sm:$0xff]
    %v72 = vld [vmem:[#allocation7 + $0xa0] sm:$0xff]
    %v73 = vld [vmem:[#allocation7 + $0xa8] sm:$0xff]
    %v74 = vld [vmem:[#allocation7 + $0xb0] sm:$0xff]
    %v75 = vld [vmem:[#allocation7 + $0xb8] sm:$0xff]
    %v76 = vld [vmem:[#allocation7 + $0xc0] sm:$0xff]
    %v77 = vld [vmem:[#allocation7 + $0xc8] sm:$0xff]
    %v78 = vld [vmem:[#allocation7 + $0xd0] sm:$0xff]
    %v79 = vld [vmem:[#allocation7 + $0xd8] sm:$0xff]
    %v80 = vld [vmem:[#allocation7 + $0xe0] sm:$0xff]
    %v81 = vld [vmem:[#allocation7 + $0xe8] sm:$0xff]
    %v82 = vld [vmem:[#allocation7 + $0xf0] sm:$0xff]
    %v83 = vld [vmem:[#allocation7 + $0xf8] sm:$0xff]
    %84 = vmatpush.xpose.msra.mxu0 %v67
    %85 = vmatpush.xpose.msra.mxu0 %v66
    %86 = vmatpush.xpose.msra.mxu0 %v65
    %87 = vmatpush.xpose.msra.mxu0 %v64
    %88 = vmatpush.xpose.msra.mxu0 %v63
    %89 = vmatpush.xpose.msra.mxu0 %v62
    %90 = vmatpush.xpose.msra.mxu0 %v61
    %91 = vmatpush.xpose.msra.mxu0 %v60
    %92 = vmatpush.xpose.msra.mxu0 %v59
    %93 = vmatpush.xpose.msra.mxu0 %v58
    %94 = vmatpush.xpose.msra.mxu0 %v57
    %95 = vmatpush.xpose.msra.mxu0 %v56
    %96 = vmatpush.xpose.msra.mxu0 %v55
    %97 = vmatpush.xpose.msra.mxu0 %v54
    %98 = vmatpush.xpose.msra.mxu0 %v53
    %99 = vmatpush.xpose.msra.mxu0 %v52
    %100 = vmatmul.f32.gmra.mxu0 %v51
    %v101 = vpop.f32.mrf.mxu0
    %v102 = vadd.f32 0.0, %v101
    %103 = vdwg.mxu0
    %104 = vmatpush.xpose.msra.mxu0 %v83
    %105 = vmatpush.xpose.msra.mxu0 %v82
    %106 = vmatpush.xpose.msra.mxu0 %v81
    %107 = vmatpush.xpose.msra.mxu0 %v80
    %108 = vmatpush.xpose.msra.mxu0 %v79
    %109 = vmatpush.xpose.msra.mxu0 %v78
    %110 = vmatpush.xpose.msra.mxu0 %v77
    %111 = vmatpush.xpose.msra.mxu0 %v76
    %112 = vmatpush.xpose.msra.mxu0 %v75
    %113 = vmatpush.xpose.msra.mxu0 %v74
    %114 = vmatpush.xpose.msra.mxu0 %v73
    %115 = vmatpush.xpose.msra.mxu0 %v72
    %116 = vmatpush.xpose.msra.mxu0 %v71
    %117 = vmatpush.xpose.msra.mxu0 %v70
    %118 = vmatpush.xpose.msra.mxu0 %v69
    %119 = vmatpush.xpose.msra.mxu0 %v68
    %120 = vmatmul.f32.gmra.mxu0 %v51
    %v121 = vpop.f32.mrf.mxu0
    %v122 = vadd.f32 0.0, %v121
    %123 = vdwg.mxu0
    %v124 = vmul.f32 %v102, 0.5
    %v125 = vmul.f32 %v122, 0.5
    %v126 = vmul.f32 %v124, 0.033333335
    %v127 = vmul.f32 %v125, 0.033333335
    %v128 = vtanh.pop %v126
    %v129 = vtanh.pop %v127
    %v130 = vmul.f32 %v128, 30.0
    %v131 = vmul.f32 %v129, 30.0
    %132 = vst [vmem:[#allocation9] sm:$0xff] %v130
    %133 = vst [vmem:[#allocation9 + $0x8] sm:$0xff] %v131
    %v134 = vld [vmem:[#allocation2] sm:$0xff]
    %v135 = vmax.f32 %v130, %v131
    %136 = vmax.xlane.f32.xlu0 %v135
    %v137 = vpop.xlane.xlu0 %136
    %v138 = vmax.f32 %v134, %v137
    %v139 = vsub.f32 %v134, %v138
    %v140 = vmul.f32 %v139, 1.442695
    %v141 = vpow.pop %v140
    %v142 = vld [vmem:[#allocation3] sm:$0xff]
    %v143 = vmul.f32 %v141, %v142
    %145 = vset.pattern.permute.xlu0 0
    %146 = vperm.xlu0 %145, %v138
    %v147 = vpop.permute.xlu0 %146
    %v149 = vsub.f32 %v130, %v147
    %v150 = vsub.f32 %v131, %v147
    %v151 = vmul.f32 %v149, 1.442695
    %v152 = vpow.pop %v151
    %v153 = vmul.f32 %v150, 1.442695
    %v154 = vpow.pop %v153
    %v155 = vadd.f32 %v152, %v154
    %156 = vadd.xlane.f32.xlu0 %v155
    %v157 = vpop.xlane.xlu0 %156
    %v158 = vadd.f32 %v143, %v157
    %vm159 = vcmask 7168
    %160 = vst.msk [vmem:[#allocation3] sm:$0xff] %vm159, %v158
    %161 = vst.msk [vmem:[#allocation2] sm:$0xff] %vm159, %v138
    // Predicated region
    $region22: #{tpu_custom_call.1} parent=1 // pred_check
      %p162 = pneg %p44
    $region23: #{tpu_custom_call.1} parent=1 // pred_check_branch
      %164 = sbr.rel (%p162) target = $region25
    $region24: #{tpu_custom_call.1} parent=1 // pred_region
      %v165 = vld [vmem:[#allocation2] sm:$0xff]
      %v166 = vld [vmem:[#allocation3] sm:$0xff]
      %v167 = vlog2.pop %v166
      %v168 = vmul.f32 %v167, 0.6931472
      %v169 = vadd.f32 %v165, %v168
      %170 = vst.msk [vmem:[%s3] sm:$0xff] %vm159, %v169
    $region25: #{tpu_custom_call.1} parent=1 // pred_fallthru
      _
    // Predicated region
    $region26: #{tpu_custom_call.1} parent=1 // pred_check
      _
    $region27: #{tpu_custom_call.1} parent=1 // pred_check_branch
      %172 = sbr.rel (0) target = $region29
    $region28: #{tpu_custom_call.1} parent=1 // pred_region
      %174 = vsyncadd [#allocation6], 0
      %s176 = sshll.u32 [#allocation9], 4
      %s177 = int_to_ptr.vmem [resolvable:$true] %s176
      %s178 = sshll.u32 %s2, 4
      %s179 = int_to_ptr.hbm [resolvable:$true] %s178
      %181 = dma.vmem_to_hbm [thread:$0]  %s177, 256, %s179, [#allocation6]
    $region29: #{tpu_custom_call.1} parent=1 // pred_fallthru
      _
    // Predicated region
    $region30: #{tpu_custom_call.1} parent=1 // pred_check
      _
    $region31: #{tpu_custom_call.1} parent=1 // pred_check_branch
      %183 = sbr.rel (0) target = $region33
    $region32: #{tpu_custom_call.1} parent=1 // pred_region
      _
    $region33: #{tpu_custom_call.1} parent=1 // pred_fallthru
      _
    // Predicated region
    $region34: #{tpu_custom_call.1} parent=1 // pred_check
      _
    $region35: #{tpu_custom_call.1} parent=1 // pred_check_branch
      %185 = sbr.rel (0) target = $region37
    $region36: #{tpu_custom_call.1} parent=1 // pred_region
      %187 = dma.done [#allocation6], 256
    $region37: #{tpu_custom_call.1} parent=1 // pred_fallthru
      _
    // Predicated region
    $region38: #{tpu_custom_call.1} parent=1 // pred_check
      _
    $region39: #{tpu_custom_call.1} parent=1 // pred_check_branch
      %189 = sbr.rel (0) target = $region41
    $region40: #{tpu_custom_call.1} parent=1 // pred_region
      _
    $region41: #{tpu_custom_call.1} parent=1 // pred_fallthru
      _
    %190 = vsyncpa [#allocation5], 1
    %191 = vsyncpa [#allocation8], 1
    %192 = vsyncpa [#allocation6], 1

</llo_original>
